<compile_context>
chip_gen: v7x
topology: tpu7x:2x2x1
jax: 0.10.0
libtpu: 0.0.40
codegen_flags: <defaults>
</compile_context>

<pallas_src>
import math
import functools

import jax
import jax.numpy as jnp
from jax.experimental import pallas as pl
from jax.experimental.pallas import tpu as pltpu


# ---------------------------------------------------------------------------
# Kernels
# ---------------------------------------------------------------------------
def _pe_add_kernel(x_ref, pos_ref, o_ref):
    # Pure bandwidth-bound elementwise add; the batch broadcast lives entirely
    # in the BlockSpec index maps (pos block index constant across lane axis).
    o_ref[...] = (x_ref[...] + pos_ref[...]).astype(o_ref.dtype)


def _pe_add_dropout_prng_kernel(seed_ref, x_ref, pos_ref, o_ref, *,
                                threshold, inv_keep):
    # Dropout mask generated on-chip (VPU work hidden under HBM stalls);
    # per-block seed offset decorrelates grid blocks.
    blk = pl.program_id(0) * pl.num_programs(1) + pl.program_id(1)
    pltpu.prng_seed(seed_ref[0] + blk)
    bits = pltpu.bitcast(pltpu.prng_random_bits(x_ref.shape), jnp.uint32)
    keep = bits < jnp.uint32(threshold)
    y = (x_ref[...] + pos_ref[...]).astype(jnp.float32)
    o_ref[...] = jnp.where(keep, y * jnp.float32(inv_keep),
                           jnp.float32(0.0)).astype(o_ref.dtype)


def _pe_add_dropout_mask_kernel(x_ref, pos_ref, mask_ref, o_ref, *, inv_keep):
    # Fallback path (interpret mode, etc.): 0/1 keep-mask streamed from HBM,
    # 1/(1-p) applied as an f32 scalar here (not baked into a rounded mask).
    y = (x_ref[...] + pos_ref[...]).astype(jnp.float32)
    o_ref[...] = (y * mask_ref[...].astype(jnp.float32)
                  * jnp.float32(inv_keep)).astype(o_ref.dtype)


# ---------------------------------------------------------------------------
# Tiling helpers (generation-aware)
# ---------------------------------------------------------------------------
def _hw_budgets():
    """Returns (per-block byte target, vmem_limit_bytes)."""
    try:
        vmem = int(pltpu.get_tpu_info().vmem_capacity_bytes)
    except Exception:
        vmem = 128 * 1024 * 1024
    if vmem <= 64 * 1024 * 1024:            # v7x-class: 64 MiB VMEM
        return 4 * 1024 * 1024, 48 * 1024 * 1024
    return 8 * 1024 * 1024, 64 * 1024 * 1024  # v5e / v6e: 128 MiB VMEM


def _choose_lane_tile(B, E, itemsize, sublane_mult, target_bytes):
    """Lane-block width tn: E-aligned, 128-aligned when possible, divides B*E."""
    BE = B * E
    k = 128 // math.gcd(E, 128)             # smallest k with (k*E) % 128 == 0
    if B % k != 0:
        # Degenerate small/odd shapes: full-extent trailing block (always legal).
        return BE
    base = k * E
    nb = BE // base
    max_tn = max(base, target_bytes // max(sublane_mult * itemsize, 1))
    tn = base
    for m in range(1, nb + 1):
        cand = m * base
        if nb % m != 0 or cand > max_tn:
            continue
        tn = cand
        if cand >= 512:                      # lane-dense, unmasked vst
            break
    return tn


def _choose_seq_tile(S_pad, tn, itemsize, sublane_mult, target_bytes):
    """Largest sublane-aligned divisor of S_pad keeping a (ts, tn) block under
    ~target_bytes (so double-buffered streams fit VMEM on every generation)."""
    max_rows = max(sublane_mult, target_bytes // max(tn * itemsize, 1))
    limit = min(S_pad, max_rows)
    limit -= limit % sublane_mult
    for cand in range(limit, sublane_mult - 1, -sublane_mult):
        if S_pad % cand == 0:
            return cand
    return sublane_mult


# ---------------------------------------------------------------------------
# Wrapper
# ---------------------------------------------------------------------------
def positional_encoding(token_embedding, pos_embedding_table, *,
                        dropout_p=0.0, training=False, rng_key=None):
    """token_embedding: [S, B, E]; pos_embedding_table: [maxlen, E]."""
    S, B, E = token_embedding.shape
    dtype = token_embedding.dtype
    itemsize = jnp.dtype(dtype).itemsize
    BE = B * E

    block_bytes, vmem_limit = _hw_budgets()
    sublane_mult = 8 * max(1, 4 // itemsize)       # 8 f32 / 16 bf16 / 32 int8

    # Pad seq axis to a sublane multiple so a legal divisor tile always exists.
    S_pad = ((S + sublane_mult - 1) // sublane_mult) * sublane_mult

    tn = _choose_lane_tile(B, E, itemsize, sublane_mult, block_bytes)
    ts = _choose_seq_tile(S_pad, tn, itemsize, sublane_mult, block_bytes)

    # Keep >=2 parallel grid steps when possible (v7x has 2 TensorCores).
    if (S_pad // ts) * (BE // tn) < 2 and S_pad // sublane_mult >= 2:
        ts = max(sublane_mult, (ts // 2) // sublane_mult * sublane_mult)
        while S_pad % ts:
            ts -= sublane_mult
    grid = (S_pad // ts, BE // tn)

    # x: [S, B, E] -> [S_pad, B*E]  (trailing dims contiguous -> cheap reshape).
    x2 = token_embedding.reshape(S, BE)
    pos = pos_embedding_table[:S].astype(dtype)                    # [S, E]
    if S_pad != S:
        x2 = jnp.pad(x2, ((0, S_pad - S), (0, 0)))
        pos = jnp.pad(pos, ((0, S_pad - S), (0, 0)))
    # Widen pos ONCE to the lane-block width (tn // E copies; tn <= ~512 lanes
    # in the common case, so this is tiny compared with B*E).
    pos_wide = jnp.tile(pos, (1, tn // E))                         # [S_pad, tn]

    use_dropout = bool(training) and float(dropout_p) > 0.0

    flops = S_pad * BE * (2 if use_dropout else 1)
    bytes_accessed = (2 * S_pad * BE + S_pad * tn) * itemsize
    cost = pl.CostEstimate(flops=flops, transcendentals=0,
                           bytes_accessed=bytes_accessed)
    cparams = pltpu.CompilerParams(
        dimension_semantics=("parallel", "parallel"),
        vmem_limit_bytes=vmem_limit)
    out_shape = jax.ShapeDtypeStruct((S_pad, BE), dtype)

    if not use_dropout:
        out2 = pl.pallas_call(
            _pe_add_kernel,
            out_shape=out_shape,
            grid_spec=pltpu.PrefetchScalarGridSpec(
                num_scalar_prefetch=0, grid=grid,
                in_specs=[pl.BlockSpec((ts, tn), lambda i, j: (i, j)),
                          pl.BlockSpec((ts, tn), lambda i, j: (i, 0))],
                out_specs=pl.BlockSpec((ts, tn), lambda i, j: (i, j))),
            compiler_params=cparams,
            cost_estimate=cost,
        )(x2, pos_wide)
        return out2[:S].reshape(S, B, E)

    keep_prob = 1.0 - float(dropout_p)
    inv_keep = (1.0 / keep_prob) if keep_prob > 0.0 else 0.0       # p==1 -> zeros
    if rng_key is None:
        rng_key = jax.random.PRNGKey(0)

    try:
        # Preferred: in-kernel PRNG dropout (no HBM mask stream).
        threshold = min(int(keep_prob * 4294967296.0), 4294967295)
        seed = jax.random.randint(rng_key, (1,), 0, jnp.iinfo(jnp.int32).max,
                                  dtype=jnp.int32)
        kernel = functools.partial(_pe_add_dropout_prng_kernel,
                                   threshold=threshold, inv_keep=inv_keep)
        out2 = pl.pallas_call(
            kernel,
            out_shape=out_shape,
            grid_spec=pltpu.PrefetchScalarGridSpec(
                num_scalar_prefetch=1, grid=grid,
                in_specs=[pl.BlockSpec((ts, tn), lambda i, j, s: (i, j)),
                          pl.BlockSpec((ts, tn), lambda i, j, s: (i, 0))],
                out_specs=pl.BlockSpec((ts, tn), lambda i, j, s: (i, j))),
            compiler_params=cparams,
            cost_estimate=cost,
        )(seed, x2, pos_wide)
        out2 = jax.block_until_ready(out2)
    except Exception:
        # TODO(synk): interpret-mode / older-runtime fallback — streams a 0/1
        # keep-mask from HBM; the f32 scale is still applied in-kernel.
        keep = jax.random.bernoulli(rng_key, p=max(keep_prob, 0.0),
                                    shape=(S_pad, BE)).astype(dtype)
        kernel = functools.partial(_pe_add_dropout_mask_kernel,
                                   inv_keep=inv_keep)
        out2 = pl.pallas_call(
            kernel,
            out_shape=out_shape,
            grid_spec=pltpu.PrefetchScalarGridSpec(
                num_scalar_prefetch=0, grid=grid,
                in_specs=[pl.BlockSpec((ts, tn), lambda i, j: (i, j)),
                          pl.BlockSpec((ts, tn), lambda i, j: (i, 0)),
                          pl.BlockSpec((ts, tn), lambda i, j: (i, j))],
                out_specs=pl.BlockSpec((ts, tn), lambda i, j: (i, j))),
            compiler_params=cparams,
            cost_estimate=cost,
        )(x2, pos_wide, keep)

    return out2[:S].reshape(S, B, E)


def make_pos_embedding_table(emb_size: int, maxlen: int = 5000, dtype=jnp.float32):
    """Replicates the PyTorch __init__ buffer (without the size-1 middle dim)."""
    den = jnp.exp(-jnp.arange(0, emb_size, 2, dtype=jnp.float32)
                  * math.log(10000.0) / emb_size)                    # (E/2,)
    pos = jnp.arange(0, maxlen, dtype=jnp.float32)[:, None]          # (maxlen, 1)
    angles = pos * den                                               # (maxlen, E/2)
    # interleave: even cols = sin, odd cols = cos
    table = jnp.stack([jnp.sin(angles), jnp.cos(angles)], axis=-1)
    return table.reshape(maxlen, emb_size).astype(dtype)             # (maxlen, E)


if __name__ == "__main__":
    key = jax.random.PRNGKey(0)
    S, B, E = 8, 2, 32
    maxlen = 64
    dropout_p = 0.1

    k_x, k_drop = jax.random.split(key)
    token_embedding = jax.random.normal(k_x, (S, B, E), dtype=jnp.float32)
    pos_table = make_pos_embedding_table(E, maxlen)

    # Eval-mode forward (dropout is identity) — deterministic, checkable.
    out = jax.block_until_ready(
        positional_encoding(token_embedding, pos_table,
                            dropout_p=dropout_p, training=False))
    ref = token_embedding + pos_table[:S][:, None, :]
    assert out.shape == (S, B, E)
    assert jnp.allclose(out, ref, atol=1e-6, rtol=1e-6)

    # Training-mode forward exercises the fused-dropout path.
    out_train = jax.block_until_ready(
        positional_encoding(token_embedding, pos_table,
                            dropout_p=dropout_p, training=True, rng_key=k_drop))
    assert out_train.shape == (S, B, E)
    # Every element is either 0 (dropped) or ref/(1-p) (kept & scaled).
    scaled = ref / (1.0 - dropout_p)
    ok = (jnp.isclose(out_train, 0.0, atol=1e-6)
          | jnp.isclose(out_train, scaled, atol=1e-5, rtol=1e-5))
    assert bool(jnp.all(ok))
    # With p=0.1 over 512 elements, an all-dropped result is (practically) impossible.
    assert bool(jnp.any(jnp.abs(out_train) > 0))

    print("KERNEL_OK")
</pallas_src>

<mosaic_0001>
module attributes {stable_mosaic.version = 11 : i64} {
  func.func @_pe_add_kernel(%arg0: i32, %arg1: i32, %arg2: memref<8x64xf32, #tpu.memory_space<vmem>>, %arg3: memref<8x64xf32, #tpu.memory_space<vmem>>, %arg4: memref<8x64xf32, #tpu.memory_space<vmem>>) attributes {dimension_semantics = [#tpu.dimension_semantics<parallel>, #tpu.dimension_semantics<parallel>], iteration_bounds = array<i64: 1, 1>, scalar_prefetch = 0 : i64, scratch_operands = 0 : i64, tpu.core_type = #tpu.core_type<tc>, window_params = [{transform_indices = @transform_0, window_bounds = array<i64: 8, 64>}, {transform_indices = @transform_1, window_bounds = array<i64: 8, 64>}, {transform_indices = @transform_2, window_bounds = array<i64: 8, 64>}]} {
    %c0 = arith.constant 0 : index
    %c0_0 = arith.constant 0 : index
    %0 = vector.load %arg2[%c0, %c0_0] : memref<8x64xf32, #tpu.memory_space<vmem>>, vector<8x64xf32>
    %c0_1 = arith.constant 0 : index
    %c0_2 = arith.constant 0 : index
    %1 = vector.load %arg3[%c0_1, %c0_2] : memref<8x64xf32, #tpu.memory_space<vmem>>, vector<8x64xf32>
    %2 = arith.addf %0, %1 : vector<8x64xf32>
    %c0_3 = arith.constant 0 : index
    %c0_4 = arith.constant 0 : index
    %3 = vector.load %arg4[%c0_3, %c0_4] : memref<8x64xf32, #tpu.memory_space<vmem>>, vector<8x64xf32>
    tpu.vector_store %arg4[%c0_3, %c0_4], %2 {strides = array<i32>} : memref<8x64xf32, #tpu.memory_space<vmem>>, vector<8x64xf32>,
    return
  }
  func.func @transform_0(%arg0: i32, %arg1: i32) -> (i32, i32) {
    %c0_i32 = arith.constant 0 : i32
    return %arg0, %arg1 : i32, i32
  }
  func.func @transform_1(%arg0: i32, %arg1: i32) -> (i32, i32) {
    %c0_i32 = arith.constant 0 : i32
    %c0_i32_0 = arith.constant 0 : i32
    return %arg0, %c0_i32 : i32, i32
  }
  func.func @transform_2(%arg0: i32, %arg1: i32) -> (i32, i32) {
    %c0_i32 = arith.constant 0 : i32
    return %arg0, %arg1 : i32, i32
  }
}

</mosaic_0001>

<llo_original>
// kernel: tpu_custom_call.1
$region0: #{tpu_custom_call.1}
  #allocation0 [shape = 'u32[]', space=smem, size = 0x4, offset = 0x4, fixed_abs, tag = 'smem constant byte address 0x4 - core index']
  #allocation1 [shape = 'u32[144,128]{1,0:T(1,128)}', space=vmem, size = 0x12000, scoped, tag = 'internal scratch']
  %s0 = inlined_call_operand.hbm [shape: f32[8,64], index: 0, kind: input, shape index: {}]
  %s1 = inlined_call_operand.hbm [shape: f32[8,64], index: 1, kind: input, shape index: {}]
  %s2 = inlined_call_operand.hbm [shape: f32[8,64], index: 2, kind: output, shape index: {}]
  %s3 = sld [smem:[#allocation0]]
  $region26: #{tpu_custom_call.1} parent=0
    _
  %s5 = ssub.s32 1, %s3
  %s6 = scalar_select 0, %s5, %s3
  $region1: #{tpu_custom_call.1} parent=0
    #allocation2 [shape = 'u8[4096]{0}', space=vmem, size = 0x1000, scoped, tag = 'input window, operand 0, single buffered']
    #allocation3 [shape = 's32[1]{0}', space=sflag, size = 0x4, scoped, tag = 'scoped memory for tpu_custom_call.1']
    #allocation4 [shape = 's32[1]{0}', space=sflag, size = 0x4, scoped, tag = 'scoped memory for tpu_custom_call.1']
    #allocation5 [shape = 'u8[4096]{0}', space=vmem, size = 0x1000, scoped, tag = 'input window, operand 1, single buffered']
    #allocation6 [shape = 's32[1]{0}', space=sflag, size = 0x4, scoped, tag = 'scoped memory for tpu_custom_call.1']
    #allocation7 [shape = 'u8[4096]{0}', space=vmem, size = 0x1000, scoped, tag = 'output window, operand 0, single buffered']
    %7 = vsyncpa [#allocation3], 0
    %8 = vsyncpa [#allocation6], 0
    %9 = vsyncpa [#allocation4], 0
    // Predicated region
    $region2: #{tpu_custom_call.1} parent=1 // pred_check
      _
    $region3: #{tpu_custom_call.1} parent=1 // pred_check_branch
      %11 = sbr.rel (0) target = $region5
    $region4: #{tpu_custom_call.1} parent=1 // pred_region
      %s13 = ssub.s32 128, 128
      %14 = vsyncadd [#allocation3], %s13
      %s16 = sshll.u32 [#allocation2], 4
      %s17 = int_to_ptr.vmem [resolvable:$true] %s16
      %19 = dma.hbm_to_vmem [thread:$0]  %s0, 128, %s17, [#allocation3]
    $region5: #{tpu_custom_call.1} parent=1 // pred_fallthru
      _
    // Predicated region
    $region6: #{tpu_custom_call.1} parent=1 // pred_check
      _
    $region7: #{tpu_custom_call.1} parent=1 // pred_check_branch
      %21 = sbr.rel (0) target = $region9
    $region8: #{tpu_custom_call.1} parent=1 // pred_region
      %s23 = ssub.s32 128, 128
      %24 = vsyncadd [#allocation6], %s23
      %s26 = sshll.u32 [#allocation5], 4
      %s27 = int_to_ptr.vmem [resolvable:$true] %s26
      %29 = dma.hbm_to_vmem [thread:$0]  %s1, 128, %s27, [#allocation6]
    $region9: #{tpu_custom_call.1} parent=1 // pred_fallthru
      _
    // Predicated region
    $region10: #{tpu_custom_call.1} parent=1 // pred_check
      _
    $region11: #{tpu_custom_call.1} parent=1 // pred_check_branch
      %31 = sbr.rel (0) target = $region13
    $region12: #{tpu_custom_call.1} parent=1 // pred_region
      %32 = dma.done [#allocation3], 128
    $region13: #{tpu_custom_call.1} parent=1 // pred_fallthru
      _
    // Predicated region
    $region14: #{tpu_custom_call.1} parent=1 // pred_check
      _
    $region15: #{tpu_custom_call.1} parent=1 // pred_check_branch
      %34 = sbr.rel (0) target = $region17
    $region16: #{tpu_custom_call.1} parent=1 // pred_region
      %35 = dma.done [#allocation6], 128
    $region17: #{tpu_custom_call.1} parent=1 // pred_fallthru
      _
    %v36 = vld [vmem:[#allocation2] sm:$0xff]
    %v37 = vld [vmem:[#allocation5] sm:$0xff]
    %v38 = vadd.f32 %v36, %v37
    %vm39 = vcmask 523264
    %40 = vst.msk [vmem:[#allocation7] sm:$0xff] %vm39, %v38
    // Predicated region
    $region18: #{tpu_custom_call.1} parent=1 // pred_check
      _
    $region19: #{tpu_custom_call.1} parent=1 // pred_check_branch
      %42 = sbr.rel (0) target = $region21
    $region20: #{tpu_custom_call.1} parent=1 // pred_region
      %s44 = ssub.s32 128, 128
      %45 = vsyncadd [#allocation4], %s44
      %s47 = sshll.u32 [#allocation7], 4
      %s48 = int_to_ptr.vmem [resolvable:$true] %s47
      %50 = dma.vmem_to_hbm [thread:$0]  %s48, 128, %s2, [#allocation4]
    $region21: #{tpu_custom_call.1} parent=1 // pred_fallthru
      _
    // Predicated region
    $region22: #{tpu_custom_call.1} parent=1 // pred_check
      _
    $region23: #{tpu_custom_call.1} parent=1 // pred_check_branch
      %52 = sbr.rel (0) target = $region25
    $region24: #{tpu_custom_call.1} parent=1 // pred_region
      %53 = dma.done [#allocation4], 128
    $region25: #{tpu_custom_call.1} parent=1 // pred_fallthru
      _
    %54 = vsyncpa [#allocation3], 1
    %55 = vsyncpa [#allocation6], 1
    %56 = vsyncpa [#allocation4], 1

</llo_original>
